<compile_context>
chip_gen: v5e
topology: v5e:2x2
jax: 0.10.0
libtpu: 0.0.40
codegen_flags: <defaults>
</compile_context>

<pallas_src>
import functools

import jax
import jax.numpy as jnp
from jax import lax
from jax.experimental import pallas as pl
from jax.experimental.pallas import tpu as pltpu


def _fused_attention_kernel(x_ref, wqkv_ref, wout_ref, b_ref, o_ref, *, scale):
    # x_ref    : (1, N, D)      one batch element's tokens
    # wqkv_ref : (H, D, 3*dh)   per-head [Wq | Wk | Wv], resident across the grid
    # wout_ref : (H, dh, D)     per-head rows of the to_out weight, resident
    # b_ref    : (1, D)         to_out bias (kept f32)
    # o_ref    : (1, N, D)      fused attention + output-projection result (lane-dense)
    n = x_ref.shape[1]
    d_model = x_ref.shape[2]
    heads = wqkv_ref.shape[0]
    dh = wqkv_ref.shape[2] // 3
    mxu_dtype = x_ref.dtype          # bf16 when the wrapper casts operands, else f32

    x = x_ref[...].reshape(n, d_model)          # drop leading 1 (free reshape)

    acc = jnp.zeros((n, d_model), jnp.float32)
    # Static unroll over heads (H is small): full LLO scheduler visibility, only 2-D MXU
    # matmuls, per-head intermediates die inside the iteration, only `acc` carries.
    for h in range(heads):
        w_h = wqkv_ref[h]                                            # (D, 3*dh)
        # One fused q/k/v projection matmul per head (3*dh output lanes), f32 accumulate.
        qkv = jnp.dot(x, w_h, preferred_element_type=jnp.float32)    # (N, 3*dh)
        q = qkv[:, :dh] * scale            # scale q, not dots: N*dh muls instead of N*N
        k = qkv[:, dh:2 * dh]
        v = qkv[:, 2 * dh:]

        # dots = q @ k^T : contract the dh axis (no explicit transpose), MXU, f32 acc.
        dots = lax.dot_general(q.astype(mxu_dtype), k.astype(mxu_dtype),
                               (((1,), (1,)), ((), ())),
                               preferred_element_type=jnp.float32)    # (N, N)

        # Numerically stable softmax over keys, kept in f32; divide -> EUP reciprocal.
        dots = dots - jnp.max(dots, axis=-1, keepdims=True)
        e = jnp.exp(dots)
        attn = e * pl.reciprocal(jnp.sum(e, axis=-1, keepdims=True), approx=True)

        out_h = jnp.dot(attn.astype(mxu_dtype), v.astype(mxu_dtype),
                        preferred_element_type=jnp.float32)           # (N, dh)

        # Head-concat + to_out Linear folded into a per-head accumulation:
        #   out = concat_h(out_h) @ W_out  ==  sum_h out_h @ W_out[h*dh:(h+1)*dh, :]
        acc = acc + jnp.dot(out_h.astype(mxu_dtype), wout_ref[h],
                            preferred_element_type=jnp.float32)       # (N, D)

    acc = acc + b_ref[...].astype(jnp.float32)
    o_ref[...] = acc.reshape(1, n, d_model).astype(o_ref.dtype)


def attention_forward(x, w_qkv, w_out, b_out, *, heads, compute_dtype=None):
    """Attention.forward(x) with mask=None, dropout p=0.

    x     : (B, N, D)
    w_qkv : (D, 3*inner_dim)  applied as x @ w_qkv  (== torch to_qkv.weight.T)
    w_out : (inner_dim, D)    applied as y @ w_out  (== torch to_out[0].weight.T)
    b_out : (D,)
    compute_dtype: optionally cast MXU operands (x, weights) e.g. to jnp.bfloat16;
                   softmax/accumulation stay f32, output stays x.dtype.
    """
    B, N, D = x.shape
    inner_dim = w_qkv.shape[1] // 3
    dh = inner_dim // heads
    scale = float(D) ** -0.5   # exactly as in the reference module (dim ** -0.5)

    # ---- host-side weight re-layout (pure layout plumbing, done once) -------------
    wq, wk, wv = jnp.split(w_qkv, 3, axis=1)                    # each (D, inner_dim)

    def _per_head(w):                                           # (D, inner) -> (H, D, dh)
        return jnp.transpose(w.reshape(D, heads, dh), (1, 0, 2))

    w_qkv_h = jnp.concatenate(
        [_per_head(wq), _per_head(wk), _per_head(wv)], axis=-1)  # (H, D, 3*dh)
    w_out_h = w_out.reshape(heads, dh, D)                        # (H, dh, D)
    b2 = b_out.reshape(1, D).astype(jnp.float32)                 # bias kept f32

    x_op = x
    if compute_dtype is not None:
        x_op = x.astype(compute_dtype)
        w_qkv_h = w_qkv_h.astype(compute_dtype)
        w_out_h = w_out_h.astype(compute_dtype)

    # ---- scoped-VMEM budget derived from actual tile sizes (capped for v7x) -------
    isz = jnp.dtype(x_op.dtype).itemsize
    osz = jnp.dtype(x.dtype).itemsize
    blk = 2 * N * D * (isz + osz)                                 # x-in + out blocks, 2-deep
    wts = 2 * (heads * D * 3 * dh + heads * dh * D) * isz + 2 * D * 4
    inter = 4 * (N * 3 * dh + 3 * N * N + N * dh + 2 * N * D)     # f32, one head live
    vmem_limit = int(min(48 << 20, max(16 << 20, 4 * (blk + wts + inter))))

    out = pl.pallas_call(
        functools.partial(_fused_attention_kernel, scale=scale),
        out_shape=jax.ShapeDtypeStruct((B, N, D), x.dtype),
        grid=(B,),
        in_specs=[
            pl.BlockSpec((1, N, D), lambda b: (b, 0, 0)),          # per-batch token block
            pl.BlockSpec((heads, D, 3 * dh), lambda b: (0, 0, 0)),  # resident fused W_qkv
            pl.BlockSpec((heads, dh, D), lambda b: (0, 0, 0)),      # resident W_out (per-head)
            pl.BlockSpec((1, D), lambda b: (0, 0)),                 # resident bias
        ],
        out_specs=pl.BlockSpec((1, N, D), lambda b: (b, 0, 0)),     # lane-dense (D) output
        compiler_params=pltpu.CompilerParams(
            dimension_semantics=("parallel",),
            vmem_limit_bytes=vmem_limit,
        ),
    )(x_op, w_qkv_h, w_out_h, b2)

    return out


def _reference(x, w_qkv, w_out, b_out, heads):
    """Plain-JAX reference of the torch Attention.forward (mask=None)."""
    B, N, D = x.shape
    inner = w_qkv.shape[1] // 3
    dh = inner // heads
    qkv = x @ w_qkv
    q, k, v = jnp.split(qkv, 3, axis=-1)

    def split_heads(t):
        return jnp.transpose(t.reshape(B, N, heads, dh), (0, 2, 1, 3))

    q, k, v = split_heads(q), split_heads(k), split_heads(v)
    dots = jnp.einsum("bhid,bhjd->bhij", q, k) * (float(D) ** -0.5)
    attn = jax.nn.softmax(dots, axis=-1)
    out = jnp.einsum("bhij,bhjd->bhid", attn, v)
    out = jnp.transpose(out, (0, 2, 1, 3)).reshape(B, N, inner)
    return out @ w_out + b_out


if __name__ == "__main__":
    # Small deterministic example: batch=2, seq=8, dim=32, heads=4, dim_head=16.
    B, N, D = 2, 8, 32
    heads, dim_head = 4, 16
    inner_dim = heads * dim_head

    key = jax.random.PRNGKey(0)
    kx, kq, ko, kb = jax.random.split(key, 4)
    x = jax.random.normal(kx, (B, N, D), dtype=jnp.float32)
    w_qkv = jax.random.normal(kq, (D, 3 * inner_dim), dtype=jnp.float32) * 0.1
    w_out = jax.random.normal(ko, (inner_dim, D), dtype=jnp.float32) * 0.1
    b_out = jax.random.normal(kb, (D,), dtype=jnp.float32) * 0.01

    ref = _reference(x, w_qkv, w_out, b_out, heads)

    # f32 path (tight tolerance; approx reciprocal accounts for the small slack).
    out = attention_forward(x, w_qkv, w_out, b_out, heads=heads)
    jax.block_until_ready(out)
    assert out.shape == (B, N, D)
    assert jnp.allclose(out, ref, atol=2e-3, rtol=2e-3), float(jnp.max(jnp.abs(out - ref)))

    # bf16 MXU-operand path (looser tolerance vs the f32 reference, as expected for bf16).
    out_bf16 = attention_forward(x, w_qkv, w_out, b_out, heads=heads,
                                 compute_dtype=jnp.bfloat16)
    jax.block_until_ready(out_bf16)
    assert out_bf16.shape == (B, N, D)
    assert jnp.allclose(out_bf16, ref, atol=5e-2, rtol=5e-2), \
        float(jnp.max(jnp.abs(out_bf16 - ref)))

    print("KERNEL_OK")
</pallas_src>

<mosaic_0001>
module attributes {stable_mosaic.version = 11 : i64} {
  func.func @_fused_attention_kernel(%arg0: i32, %arg1: memref<1x8x32xf32, #tpu.memory_space<vmem>>, %arg2: memref<4x32x48xf32, #tpu.memory_space<vmem>>, %arg3: memref<4x16x32xf32, #tpu.memory_space<vmem>>, %arg4: memref<1x32xf32, #tpu.memory_space<vmem>>, %arg5: memref<1x8x32xf32, #tpu.memory_space<vmem>>) attributes {dimension_semantics = [#tpu.dimension_semantics<parallel>], iteration_bounds = array<i64: 2>, scalar_prefetch = 0 : i64, scratch_operands = 0 : i64, tpu.core_type = #tpu.core_type<tc>, window_params = [{transform_indices = @transform_0, window_bounds = array<i64: 1, 8, 32>}, {pipeline_mode = #tpu.pipeline_mode<synchronous>, transform_indices = @transform_1, window_bounds = array<i64: 4, 32, 48>}, {pipeline_mode = #tpu.pipeline_mode<synchronous>, transform_indices = @transform_2, window_bounds = array<i64: 4, 16, 32>}, {pipeline_mode = #tpu.pipeline_mode<synchronous>, transform_indices = @transform_3, window_bounds = array<i64: 1, 32>}, {transform_indices = @transform_4, window_bounds = array<i64: 1, 8, 32>}]} {
    %c0 = arith.constant 0 : index
    %c0_0 = arith.constant 0 : index
    %c0_1 = arith.constant 0 : index
    %0 = vector.load %arg1[%c0, %c0_0, %c0_1] : memref<1x8x32xf32, #tpu.memory_space<vmem>>, vector<1x8x32xf32>
    %1 = vector.shape_cast %0 : vector<1x8x32xf32> to vector<8x32xf32>
    %cst = arith.constant 0.000000e+00 : f32
    %2 = vector.broadcast %cst : f32 to vector<8x32xf32>
    %c0_2 = arith.constant 0 : index
    %c0_3 = arith.constant 0 : index
    %c0_4 = arith.constant 0 : index
    %3 = vector.load %arg2[%c0_2, %c0_3, %c0_4] : memref<4x32x48xf32, #tpu.memory_space<vmem>>, vector<1x32x48xf32>
    %4 = vector.shape_cast %3 : vector<1x32x48xf32> to vector<32x48xf32>
    %cst_5 = arith.constant dense<0.000000e+00> : vector<8x48xf32>
    %5 = tpu.matmul %1, %4, %cst_5 {dimension_numbers = #tpu.dot_dimension_numbers<[1], [0], [0], [1], [0, 0, 1, 1], [], []>} : vector<8x32xf32>, vector<32x48xf32>, vector<8x48xf32> -> vector<8x48xf32>
    %6 = vector.extract_strided_slice %5 {offsets = [0, 0], sizes = [8, 16], strides = [1, 1]} : vector<8x48xf32> to vector<8x16xf32>
    %cst_6 = arith.constant 0.176776692 : f32
    %7 = vector.broadcast %cst_6 : f32 to vector<8x16xf32>
    %8 = arith.mulf %6, %7 : vector<8x16xf32>
    %9 = vector.extract_strided_slice %5 {offsets = [0, 16], sizes = [8, 16], strides = [1, 1]} : vector<8x48xf32> to vector<8x16xf32>
    %10 = vector.extract_strided_slice %5 {offsets = [0, 32], sizes = [8, 16], strides = [1, 1]} : vector<8x48xf32> to vector<8x16xf32>
    %cst_7 = arith.constant dense<0.000000e+00> : vector<8x8xf32>
    %11 = tpu.matmul %8, %9, %cst_7 {dimension_numbers = #tpu.dot_dimension_numbers<[1], [1], [0], [0], [0, 0, 1, 0], [], []>} : vector<8x16xf32>, vector<8x16xf32>, vector<8x8xf32> -> vector<8x8xf32>
    %cst_8 = arith.constant dense<0xFF800000> : vector<8xf32>
    %12 = vector.multi_reduction <maximumf>, %11, %cst_8 [1] : vector<8x8xf32> to vector<8xf32>
    %13 = vector.shape_cast %12 : vector<8xf32> to vector<8x1xf32>
    %14 = vector.broadcast %13 : vector<8x1xf32> to vector<8x8xf32>
    %15 = arith.subf %11, %14 : vector<8x8xf32>
    %16 = math.exp %15 : vector<8x8xf32>
    %cst_9 = arith.constant dense<0.000000e+00> : vector<8xf32>
    %17 = vector.multi_reduction <add>, %16, %cst_9 [1] : vector<8x8xf32> to vector<8xf32>
    %18 = vector.shape_cast %17 : vector<8xf32> to vector<8x1xf32>
    %19 = tpu.reciprocal %18 {approx = true} : vector<8x1xf32> -> vector<8x1xf32>
    %20 = vector.broadcast %19 : vector<8x1xf32> to vector<8x8xf32>
    %21 = arith.mulf %16, %20 : vector<8x8xf32>
    %cst_10 = arith.constant dense<0.000000e+00> : vector<8x16xf32>
    %22 = tpu.matmul %21, %10, %cst_10 {dimension_numbers = #tpu.dot_dimension_numbers<[1], [0], [0], [1], [0, 0, 1, 1], [], []>} : vector<8x8xf32>, vector<8x16xf32>, vector<8x16xf32> -> vector<8x16xf32>
    %c0_11 = arith.constant 0 : index
    %c0_12 = arith.constant 0 : index
    %c0_13 = arith.constant 0 : index
    %23 = vector.load %arg3[%c0_11, %c0_12, %c0_13] : memref<4x16x32xf32, #tpu.memory_space<vmem>>, vector<1x16x32xf32>
    %24 = vector.shape_cast %23 : vector<1x16x32xf32> to vector<16x32xf32>
    %cst_14 = arith.constant dense<0.000000e+00> : vector<8x32xf32>
    %25 = tpu.matmul %22, %24, %cst_14 {dimension_numbers = #tpu.dot_dimension_numbers<[1], [0], [0], [1], [0, 0, 1, 1], [], []>} : vector<8x16xf32>, vector<16x32xf32>, vector<8x32xf32> -> vector<8x32xf32>
    %26 = arith.addf %2, %25 : vector<8x32xf32>
    %c1 = arith.constant 1 : index
    %c0_15 = arith.constant 0 : index
    %c0_16 = arith.constant 0 : index
    %27 = vector.load %arg2[%c1, %c0_15, %c0_16] : memref<4x32x48xf32, #tpu.memory_space<vmem>>, vector<1x32x48xf32>
    %28 = vector.shape_cast %27 : vector<1x32x48xf32> to vector<32x48xf32>
    %cst_17 = arith.constant dense<0.000000e+00> : vector<8x48xf32>
    %29 = tpu.matmul %1, %28, %cst_17 {dimension_numbers = #tpu.dot_dimension_numbers<[1], [0], [0], [1], [0, 0, 1, 1], [], []>} : vector<8x32xf32>, vector<32x48xf32>, vector<8x48xf32> -> vector<8x48xf32>
    %30 = vector.extract_strided_slice %29 {offsets = [0, 0], sizes = [8, 16], strides = [1, 1]} : vector<8x48xf32> to vector<8x16xf32>
    %cst_18 = arith.constant 0.176776692 : f32
    %31 = vector.broadcast %cst_18 : f32 to vector<8x16xf32>
    %32 = arith.mulf %30, %31 : vector<8x16xf32>
    %33 = vector.extract_strided_slice %29 {offsets = [0, 16], sizes = [8, 16], strides = [1, 1]} : vector<8x48xf32> to vector<8x16xf32>
    %34 = vector.extract_strided_slice %29 {offsets = [0, 32], sizes = [8, 16], strides = [1, 1]} : vector<8x48xf32> to vector<8x16xf32>
    %cst_19 = arith.constant dense<0.000000e+00> : vector<8x8xf32>
    %35 = tpu.matmul %32, %33, %cst_19 {dimension_numbers = #tpu.dot_dimension_numbers<[1], [1], [0], [0], [0, 0, 1, 0], [], []>} : vector<8x16xf32>, vector<8x16xf32>, vector<8x8xf32> -> vector<8x8xf32>
    %cst_20 = arith.constant dense<0xFF800000> : vector<8xf32>
    %36 = vector.multi_reduction <maximumf>, %35, %cst_20 [1] : vector<8x8xf32> to vector<8xf32>
    %37 = vector.shape_cast %36 : vector<8xf32> to vector<8x1xf32>
    %38 = vector.broadcast %37 : vector<8x1xf32> to vector<8x8xf32>
    %39 = arith.subf %35, %38 : vector<8x8xf32>
    %40 = math.exp %39 : vector<8x8xf32>
    %cst_21 = arith.constant dense<0.000000e+00> : vector<8xf32>
    %41 = vector.multi_reduction <add>, %40, %cst_21 [1] : vector<8x8xf32> to vector<8xf32>
    %42 = vector.shape_cast %41 : vector<8xf32> to vector<8x1xf32>
    %43 = tpu.reciprocal %42 {approx = true} : vector<8x1xf32> -> vector<8x1xf32>
    %44 = vector.broadcast %43 : vector<8x1xf32> to vector<8x8xf32>
    %45 = arith.mulf %40, %44 : vector<8x8xf32>
    %cst_22 = arith.constant dense<0.000000e+00> : vector<8x16xf32>
    %46 = tpu.matmul %45, %34, %cst_22 {dimension_numbers = #tpu.dot_dimension_numbers<[1], [0], [0], [1], [0, 0, 1, 1], [], []>} : vector<8x8xf32>, vector<8x16xf32>, vector<8x16xf32> -> vector<8x16xf32>
    %c1_23 = arith.constant 1 : index
    %c0_24 = arith.constant 0 : index
    %c0_25 = arith.constant 0 : index
    %47 = vector.load %arg3[%c1_23, %c0_24, %c0_25] : memref<4x16x32xf32, #tpu.memory_space<vmem>>, vector<1x16x32xf32>
    %48 = vector.shape_cast %47 : vector<1x16x32xf32> to vector<16x32xf32>
    %cst_26 = arith.constant dense<0.000000e+00> : vector<8x32xf32>
    %49 = tpu.matmul %46, %48, %cst_26 {dimension_numbers = #tpu.dot_dimension_numbers<[1], [0], [0], [1], [0, 0, 1, 1], [], []>} : vector<8x16xf32>, vector<16x32xf32>, vector<8x32xf32> -> vector<8x32xf32>
    %50 = arith.addf %26, %49 : vector<8x32xf32>
    %c2 = arith.constant 2 : index
    %c0_27 = arith.constant 0 : index
    %c0_28 = arith.constant 0 : index
    %51 = vector.load %arg2[%c2, %c0_27, %c0_28] : memref<4x32x48xf32, #tpu.memory_space<vmem>>, vector<1x32x48xf32>
    %52 = vector.shape_cast %51 : vector<1x32x48xf32> to vector<32x48xf32>
    %cst_29 = arith.constant dense<0.000000e+00> : vector<8x48xf32>
    %53 = tpu.matmul %1, %52, %cst_29 {dimension_numbers = #tpu.dot_dimension_numbers<[1], [0], [0], [1], [0, 0, 1, 1], [], []>} : vector<8x32xf32>, vector<32x48xf32>, vector<8x48xf32> -> vector<8x48xf32>
    %54 = vector.extract_strided_slice %53 {offsets = [0, 0], sizes = [8, 16], strides = [1, 1]} : vector<8x48xf32> to vector<8x16xf32>
    %cst_30 = arith.constant 0.176776692 : f32
    %55 = vector.broadcast %cst_30 : f32 to vector<8x16xf32>
    %56 = arith.mulf %54, %55 : vector<8x16xf32>
    %57 = vector.extract_strided_slice %53 {offsets = [0, 16], sizes = [8, 16], strides = [1, 1]} : vector<8x48xf32> to vector<8x16xf32>
    %58 = vector.extract_strided_slice %53 {offsets = [0, 32], sizes = [8, 16], strides = [1, 1]} : vector<8x48xf32> to vector<8x16xf32>
    %cst_31 = arith.constant dense<0.000000e+00> : vector<8x8xf32>
    %59 = tpu.matmul %56, %57, %cst_31 {dimension_numbers = #tpu.dot_dimension_numbers<[1], [1], [0], [0], [0, 0, 1, 0], [], []>} : vector<8x16xf32>, vector<8x16xf32>, vector<8x8xf32> -> vector<8x8xf32>
    %cst_32 = arith.constant dense<0xFF800000> : vector<8xf32>
    %60 = vector.multi_reduction <maximumf>, %59, %cst_32 [1] : vector<8x8xf32> to vector<8xf32>
    %61 = vector.shape_cast %60 : vector<8xf32> to vector<8x1xf32>
    %62 = vector.broadcast %61 : vector<8x1xf32> to vector<8x8xf32>
    %63 = arith.subf %59, %62 : vector<8x8xf32>
    %64 = math.exp %63 : vector<8x8xf32>
    %cst_33 = arith.constant dense<0.000000e+00> : vector<8xf32>
    %65 = vector.multi_reduction <add>, %64, %cst_33 [1] : vector<8x8xf32> to vector<8xf32>
    %66 = vector.shape_cast %65 : vector<8xf32> to vector<8x1xf32>
    %67 = tpu.reciprocal %66 {approx = true} : vector<8x1xf32> -> vector<8x1xf32>
    %68 = vector.broadcast %67 : vector<8x1xf32> to vector<8x8xf32>
    %69 = arith.mulf %64, %68 : vector<8x8xf32>
    %cst_34 = arith.constant dense<0.000000e+00> : vector<8x16xf32>
    %70 = tpu.matmul %69, %58, %cst_34 {dimension_numbers = #tpu.dot_dimension_numbers<[1], [0], [0], [1], [0, 0, 1, 1], [], []>} : vector<8x8xf32>, vector<8x16xf32>, vector<8x16xf32> -> vector<8x16xf32>
    %c2_35 = arith.constant 2 : index
    %c0_36 = arith.constant 0 : index
    %c0_37 = arith.constant 0 : index
    %71 = vector.load %arg3[%c2_35, %c0_36, %c0_37] : memref<4x16x32xf32, #tpu.memory_space<vmem>>, vector<1x16x32xf32>
    %72 = vector.shape_cast %71 : vector<1x16x32xf32> to vector<16x32xf32>
    %cst_38 = arith.constant dense<0.000000e+00> : vector<8x32xf32>
    %73 = tpu.matmul %70, %72, %cst_38 {dimension_numbers = #tpu.dot_dimension_numbers<[1], [0], [0], [1], [0, 0, 1, 1], [], []>} : vector<8x16xf32>, vector<16x32xf32>, vector<8x32xf32> -> vector<8x32xf32>
    %74 = arith.addf %50, %73 : vector<8x32xf32>
    %c3 = arith.constant 3 : index
    %c0_39 = arith.constant 0 : index
    %c0_40 = arith.constant 0 : index
    %75 = vector.load %arg2[%c3, %c0_39, %c0_40] : memref<4x32x48xf32, #tpu.memory_space<vmem>>, vector<1x32x48xf32>
    %76 = vector.shape_cast %75 : vector<1x32x48xf32> to vector<32x48xf32>
    %cst_41 = arith.constant dense<0.000000e+00> : vector<8x48xf32>
    %77 = tpu.matmul %1, %76, %cst_41 {dimension_numbers = #tpu.dot_dimension_numbers<[1], [0], [0], [1], [0, 0, 1, 1], [], []>} : vector<8x32xf32>, vector<32x48xf32>, vector<8x48xf32> -> vector<8x48xf32>
    %78 = vector.extract_strided_slice %77 {offsets = [0, 0], sizes = [8, 16], strides = [1, 1]} : vector<8x48xf32> to vector<8x16xf32>
    %cst_42 = arith.constant 0.176776692 : f32
    %79 = vector.broadcast %cst_42 : f32 to vector<8x16xf32>
    %80 = arith.mulf %78, %79 : vector<8x16xf32>
    %81 = vector.extract_strided_slice %77 {offsets = [0, 16], sizes = [8, 16], strides = [1, 1]} : vector<8x48xf32> to vector<8x16xf32>
    %82 = vector.extract_strided_slice %77 {offsets = [0, 32], sizes = [8, 16], strides = [1, 1]} : vector<8x48xf32> to vector<8x16xf32>
    %cst_43 = arith.constant dense<0.000000e+00> : vector<8x8xf32>
    %83 = tpu.matmul %80, %81, %cst_43 {dimension_numbers = #tpu.dot_dimension_numbers<[1], [1], [0], [0], [0, 0, 1, 0], [], []>} : vector<8x16xf32>, vector<8x16xf32>, vector<8x8xf32> -> vector<8x8xf32>
    %cst_44 = arith.constant dense<0xFF800000> : vector<8xf32>
    %84 = vector.multi_reduction <maximumf>, %83, %cst_44 [1] : vector<8x8xf32> to vector<8xf32>
    %85 = vector.shape_cast %84 : vector<8xf32> to vector<8x1xf32>
    %86 = vector.broadcast %85 : vector<8x1xf32> to vector<8x8xf32>
    %87 = arith.subf %83, %86 : vector<8x8xf32>
    %88 = math.exp %87 : vector<8x8xf32>
    %cst_45 = arith.constant dense<0.000000e+00> : vector<8xf32>
    %89 = vector.multi_reduction <add>, %88, %cst_45 [1] : vector<8x8xf32> to vector<8xf32>
    %90 = vector.shape_cast %89 : vector<8xf32> to vector<8x1xf32>
    %91 = tpu.reciprocal %90 {approx = true} : vector<8x1xf32> -> vector<8x1xf32>
    %92 = vector.broadcast %91 : vector<8x1xf32> to vector<8x8xf32>
    %93 = arith.mulf %88, %92 : vector<8x8xf32>
    %cst_46 = arith.constant dense<0.000000e+00> : vector<8x16xf32>
    %94 = tpu.matmul %93, %82, %cst_46 {dimension_numbers = #tpu.dot_dimension_numbers<[1], [0], [0], [1], [0, 0, 1, 1], [], []>} : vector<8x8xf32>, vector<8x16xf32>, vector<8x16xf32> -> vector<8x16xf32>
    %c3_47 = arith.constant 3 : index
    %c0_48 = arith.constant 0 : index
    %c0_49 = arith.constant 0 : index
    %95 = vector.load %arg3[%c3_47, %c0_48, %c0_49] : memref<4x16x32xf32, #tpu.memory_space<vmem>>, vector<1x16x32xf32>
    %96 = vector.shape_cast %95 : vector<1x16x32xf32> to vector<16x32xf32>
    %cst_50 = arith.constant dense<0.000000e+00> : vector<8x32xf32>
    %97 = tpu.matmul %94, %96, %cst_50 {dimension_numbers = #tpu.dot_dimension_numbers<[1], [0], [0], [1], [0, 0, 1, 1], [], []>} : vector<8x16xf32>, vector<16x32xf32>, vector<8x32xf32> -> vector<8x32xf32>
    %98 = arith.addf %74, %97 : vector<8x32xf32>
    %c0_51 = arith.constant 0 : index
    %c0_52 = arith.constant 0 : index
    %99 = vector.load %arg4[%c0_51, %c0_52] : memref<1x32xf32, #tpu.memory_space<vmem>>, vector<1x32xf32>
    %100 = vector.broadcast %99 : vector<1x32xf32> to vector<8x32xf32>
    %101 = arith.addf %98, %100 : vector<8x32xf32>
    %102 = vector.shape_cast %101 : vector<8x32xf32> to vector<1x8x32xf32>
    %c0_53 = arith.constant 0 : index
    %c0_54 = arith.constant 0 : index
    %c0_55 = arith.constant 0 : index
    %103 = vector.load %arg5[%c0_53, %c0_54, %c0_55] : memref<1x8x32xf32, #tpu.memory_space<vmem>>, vector<1x8x32xf32>
    tpu.vector_store %arg5[%c0_53, %c0_54, %c0_55], %102 {strides = array<i32>} : memref<1x8x32xf32, #tpu.memory_space<vmem>>, vector<1x8x32xf32>,
    return
  }
  func.func @transform_0(%arg0: i32) -> (i32, i32, i32) {
    %c0_i32 = arith.constant 0 : i32
    %c0_i32_0 = arith.constant 0 : i32
    %c0_i32_1 = arith.constant 0 : i32
    return %arg0, %c0_i32, %c0_i32_0 : i32, i32, i32
  }
  func.func @transform_1(%arg0: i32) -> (i32, i32, i32) {
    %c0_i32 = arith.constant 0 : i32
    %c0_i32_0 = arith.constant 0 : i32
    %c0_i32_1 = arith.constant 0 : i32
    %c0_i32_2 = arith.constant 0 : i32
    return %c0_i32, %c0_i32_0, %c0_i32_1 : i32, i32, i32
  }
  func.func @transform_2(%arg0: i32) -> (i32, i32, i32) {
    %c0_i32 = arith.constant 0 : i32
    %c0_i32_0 = arith.constant 0 : i32
    %c0_i32_1 = arith.constant 0 : i32
    %c0_i32_2 = arith.constant 0 : i32
    return %c0_i32, %c0_i32_0, %c0_i32_1 : i32, i32, i32
  }
  func.func @transform_3(%arg0: i32) -> (i32, i32) {
    %c0_i32 = arith.constant 0 : i32
    %c0_i32_0 = arith.constant 0 : i32
    %c0_i32_1 = arith.constant 0 : i32
    return %c0_i32, %c0_i32_0 : i32, i32
  }
  func.func @transform_4(%arg0: i32) -> (i32, i32, i32) {
    %c0_i32 = arith.constant 0 : i32
    %c0_i32_0 = arith.constant 0 : i32
    %c0_i32_1 = arith.constant 0 : i32
    return %arg0, %c0_i32, %c0_i32_0 : i32, i32, i32
  }
}

</mosaic_0001>

<llo_original>
// kernel: tpu_custom_call.1
$region0: #{tpu_custom_call.1}
  #allocation0 [shape = 'u32[]', space=smem, size = 0x4, offset = 0x4, fixed_abs, tag = 'smem constant byte address 0x4 - core index']
  #allocation1 [shape = 'u32[72,128]{1,0:T(1,128)}', space=vmem, size = 0x9000, scoped, tag = 'internal scratch']
  %s0 = inlined_call_operand.hbm [shape: f32[2,8,32], index: 0, kind: input, shape index: {}]
  %s1 = inlined_call_operand.hbm [shape: f32[4,32,48], index: 1, kind: input, shape index: {}]
  %s2 = inlined_call_operand.hbm [shape: f32[4,16,32], index: 2, kind: input, shape index: {}]
  %s3 = inlined_call_operand.vmem [shape: f32[1,32], index: 3, kind: input, shape index: {}]
  %s4 = inlined_call_operand.hbm [shape: f32[2,8,32], index: 4, kind: output, shape index: {}]
  %s5 = sld [smem:[#allocation0]]
  $region61: #{tpu_custom_call.1} parent=0
    _
  %s7 = ssub.s32 1, %s5
  %s8 = scalar_select 0, %s7, %s5
  $region1: #{tpu_custom_call.1} parent=0
    #allocation2 [shape = 'u8[8192]{0}', space=vmem, size = 0x2000, scoped, tag = 'input window, operand 0']
    #allocation3 [shape = 's32[2]{0}', space=sflag, size = 0x8, scoped, tag = 'scoped memory for tpu_custom_call.1']
    #allocation4 [shape = 's32[2]{0}', space=sflag, size = 0x8, scoped, tag = 'scoped memory for tpu_custom_call.1']
    #allocation5 [shape = 'u8[65536]{0}', space=vmem, size = 0x10000, scoped, tag = 'input window, operand 1, single buffered']
    #allocation6 [shape = 's32[1]{0}', space=sflag, size = 0x4, scoped, tag = 'scoped memory for tpu_custom_call.1']
    #allocation7 [shape = 'u8[32768]{0}', space=vmem, size = 0x8000, scoped, tag = 'input window, operand 2, single buffered']
    #allocation8 [shape = 'u8[8192]{0}', space=vmem, size = 0x2000, scoped, tag = 'output window, operand 0']
    %9 = vsyncpa [#allocation3], 0
    %s10 = scalar_lea.sflag [#allocation3], 1
    %11 = vsyncpa %s10, 0
    %12 = vsyncpa [#allocation6], 0
    %13 = vsyncpa [#allocation4], 0
    %s14 = scalar_lea.sflag [#allocation4], 1
    %15 = vsyncpa %s14, 0
    loop: start=0, step=1, limit=4
    $region2: #{tpu_custom_call.1} parent=1 // loop_pre_header
      _
    $region3: #{tpu_custom_call.1} parent=1 // loop_header
      %s17 = sphi 0, %s21
      %p18 = scmp.ge.s32.totalorder %s17, 4
      %s27 = sphi 0, %s29
      %s30 = sphi 0, %s27
      %s31 = sphi 0, %s30
      %s47 = sphi 0, %s31
      %s51 = sphi 0, %s51
      %s53 = sphi 0, %s51
      %s54 = sphi 0, %s53
      %s68 = sphi 0, %s54
      %s72 = sphi 0, %s72
      %s74 = sphi 0, %s72
      %s75 = sphi 0, %s74
      %s89 = sphi 0, %s75
      %s93 = sphi 0, %s93
      %s95 = sphi 0, %s93
      %s96 = sphi 0, %s95
      %s110 = sphi 0, %s96
      %s116 = sphi 0, %s118
      %s119 = sphi 0, %s116
      %s120 = sphi 0, %s119
      %s136 = sphi 0, %s120
    $region4: #{tpu_custom_call.1} parent=1 // loop_header_branch
      %20 = sbr.rel (%p18) target = $region8
    $region5: #{tpu_custom_call.1} parent=1 // loop_body
      %s22 = ssub.s32 %s17, 1
      %s23 = ssub.s32 %s17, 2
      %s24 = sadd.s32 %s17, 1
      %s25 = ssub.s32 %s17, %s24
      %p26 = scmp.eq.s32.totalorder %s25, 0
      %s28 = sadd.s32 %s27, 1
      %s29 = scalar_select %p26, %s27, %s28
      %p32 = pneg %p26
      %p33 = scmp.eq.s32.totalorder %s17, 1
      %p34 = por %p32, %p33
      %p35 = scmp.ne.s32.totalorder %s27, %s30
      %p36 = scmp.eq.s32.totalorder %s17, 0
      %p37 = por %p35, %p36
      %p38 = scmp.ne.s32.totalorder %s27, %s30
      %p39 = scmp.eq.s32.totalorder %s22, 1
      %p40 = por %p38, %p39
      %p41 = scmp.ne.s32.totalorder %s30, %s31
      %p42 = scmp.eq.s32.totalorder %s22, 0
      %p43 = por %p41, %p42
      %p44 = scmp.ne.s32.totalorder %s30, %s31
      %p45 = scmp.eq.s32.totalorder %s23, 1
      %p46 = por %p44, %p45
      %p48 = scmp.ne.s32.totalorder %s31, %s47
      %p49 = scmp.eq.s32.totalorder %s23, 0
      %p50 = por %p48, %p49
      %s52 = sadd.s32 %s51, 1
      %p55 = scmp.eq.s32.totalorder %s17, 1
      %p56 = scmp.ne.s32.totalorder %s51, %s53
      %p57 = scmp.eq.s32.totalorder %s17, 0
      %p58 = por %p56, %p57
      %p59 = scmp.ne.s32.totalorder %s51, %s53
      %p60 = scmp.eq.s32.totalorder %s22, 1
      %p61 = por %p59, %p60
      %p62 = scmp.ne.s32.totalorder %s53, %s54
      %p63 = scmp.eq.s32.totalorder %s22, 0
      %p64 = por %p62, %p63
      %p65 = scmp.ne.s32.totalorder %s53, %s54
      %p66 = scmp.eq.s32.totalorder %s23, 1
      %p67 = por %p65, %p66
      %p69 = scmp.ne.s32.totalorder %s54, %s68
      %p70 = scmp.eq.s32.totalorder %s23, 0
      %p71 = por %p69, %p70
      %s73 = sadd.s32 %s72, 1
      %p76 = scmp.eq.s32.totalorder %s17, 1
      %p77 = scmp.ne.s32.totalorder %s72, %s74
      %p78 = scmp.eq.s32.totalorder %s17, 0
      %p79 = por %p77, %p78
      %p80 = scmp.ne.s32.totalorder %s72, %s74
      %p81 = scmp.eq.s32.totalorder %s22, 1
      %p82 = por %p80, %p81
      %p83 = scmp.ne.s32.totalorder %s74, %s75
      %p84 = scmp.eq.s32.totalorder %s22, 0
      %p85 = por %p83, %p84
      %p86 = scmp.ne.s32.totalorder %s74, %s75
      %p87 = scmp.eq.s32.totalorder %s23, 1
      %p88 = por %p86, %p87
      %p90 = scmp.ne.s32.totalorder %s75, %s89
      %p91 = scmp.eq.s32.totalorder %s23, 0
      %p92 = por %p90, %p91
      %s94 = sadd.s32 %s93, 1
      %p97 = scmp.eq.s32.totalorder %s17, 1
      %p98 = scmp.ne.s32.totalorder %s93, %s95
      %p99 = scmp.eq.s32.totalorder %s17, 0
      %p100 = por %p98, %p99
      %p101 = scmp.ne.s32.totalorder %s93, %s95
      %p102 = scmp.eq.s32.totalorder %s22, 1
      %p103 = por %p101, %p102
      %p104 = scmp.ne.s32.totalorder %s95, %s96
      %p105 = scmp.eq.s32.totalorder %s22, 0
      %p106 = por %p104, %p105
      %p107 = scmp.ne.s32.totalorder %s95, %s96
      %p108 = scmp.eq.s32.totalorder %s23, 1
      %p109 = por %p107, %p108
      %p111 = scmp.ne.s32.totalorder %s96, %s110
      %p112 = scmp.eq.s32.totalorder %s23, 0
      %p113 = por %p111, %p112
      %s114 = ssub.s32 %s17, %s24
      %p115 = scmp.eq.s32.totalorder %s114, 0
      %s117 = sadd.s32 %s116, 1
      %s118 = scalar_select %p115, %s116, %s117
      %p121 = pneg %p115
      %p122 = scmp.eq.s32.totalorder %s17, 1
      %p123 = por %p121, %p122
      %p124 = scmp.ne.s32.totalorder %s116, %s119
      %p125 = scmp.eq.s32.totalorder %s17, 0
      %p126 = por %p124, %p125
      %p127 = scmp.ne.s32.totalorder %s116, %s119
      %p128 = scmp.eq.s32.totalorder %s22, 1
      %p129 = por %p127, %p128
      %p130 = scmp.ne.s32.totalorder %s119, %s120
      %p131 = scmp.eq.s32.totalorder %s22, 0
      %p132 = por %p130, %p131
      %p133 = scmp.ne.s32.totalorder %s119, %s120
      %p134 = scmp.eq.s32.totalorder %s23, 1
      %p135 = por %p133, %p134
      %p137 = scmp.ne.s32.totalorder %s120, %s136
      %p138 = scmp.eq.s32.totalorder %s23, 0
      %p139 = por %p137, %p138
      %p140 = scmp.le.s32.totalorder 1, %s17
      %p141 = scmp.lt.s32.totalorder %s17, 3
      %p142 = pnand %p140, %p141
      %p143 = pneg %p142
      // Predicated region
      $region9: #{tpu_custom_call.1} parent=5 // pred_check
        _
      $region10: #{tpu_custom_call.1} parent=5 // pred_check_branch
        %145 = sbr.rel (%p142) target = $region12
      $region11: #{tpu_custom_call.1} parent=5 // pred_region
        %s146 = ssub.s32 %s17, 1
        // Predicated region
        $region13: #{tpu_custom_call.1} parent=11 // pred_check
          %p147 = pneg %p64
        $region14: #{tpu_custom_call.1} parent=11 // pred_check_branch
          %149 = sbr.rel (%p147) target = $region16
        $region15: #{tpu_custom_call.1} parent=11 // pred_region
          %151 = vsyncadd [#allocation6], 0
          %s152 = sshll.u32 %s1, 4
          %s153 = int_to_ptr.hbm [resolvable:$true] %s152
          %s154 = sshll.u32 [#allocation5], 4
          %s155 = int_to_ptr.vmem [resolvable:$true] %s154
          %160 = dma.hbm_to_vmem [thread:$0]  %s153, 2048, %s155, [#allocation6], 128, 128, 8
        $region16: #{tpu_custom_call.1} parent=11 // pred_fallthru
          _
        // Predicated region
        $region17: #{tpu_custom_call.1} parent=11 // pred_check
          %p161 = pneg %p85
        $region18: #{tpu_custom_call.1} parent=11 // pred_check_branch
          %163 = sbr.rel (%p161) target = $region20
        $region19: #{tpu_custom_call.1} parent=11 // pred_region
          %165 = vsyncadd [#allocation6], 0
          %s166 = sshll.u32 %s2, 4
          %s167 = int_to_ptr.hbm [resolvable:$true] %s166
          %s168 = sshll.u32 [#allocation7], 4
          %s169 = int_to_ptr.vmem [resolvable:$true] %s168
          %174 = dma.hbm_to_vmem [thread:$0]  %s167, 1024, %s169, [#allocation6], 128, 128, 8
        $region20: #{tpu_custom_call.1} parent=11 // pred_fallthru
          _
        // Predicated region
        $region21: #{tpu_custom_call.1} parent=11 // pred_check
          %p175 = pneg %p106
        $region22: #{tpu_custom_call.1} parent=11 // pred_check_branch
          %177 = sbr.rel (%p175) target = $region24
        $region23: #{tpu_custom_call.1} parent=11 // pred_region
          _
        $region24: #{tpu_custom_call.1} parent=11 // pred_fallthru
          _
      $region12: #{tpu_custom_call.1} parent=5 // pred_fallthru
        _
      %p178 = scmp.lt.s32.totalorder %s17, 2
      // Predicated region
      $region25: #{tpu_custom_call.1} parent=5 // pred_check
        %p179 = pneg %p178
      $region26: #{tpu_custom_call.1} parent=5 // pred_check_branch
        %181 = sbr.rel (%p179) target = $region28
      $region27: #{tpu_custom_call.1} parent=5 // pred_region
        // Predicated region
        $region29: #{tpu_custom_call.1} parent=27 // pred_check
          %p182 = pneg %p37
        $region30: #{tpu_custom_call.1} parent=27 // pred_check_branch
          %184 = sbr.rel (%p182) target = $region32
        $region31: #{tpu_custom_call.1} parent=27 // pred_region
          %s185 = sand.u32 %s27, 1
          %s186 = scalar_lea.sflag [#allocation3], %s185
          %s187 = sand.u32 %s27, 1
          %s188 = smul.addr %s187, 8
          %s189 = scalar_lea.vmem [#allocation2], %s188
          %191 = vsyncadd %s186, 0
          %s192 = smul.addr %s17, 8
          %s193 = scalar_lea.hbm %s0, %s192
          %s195 = sshll.u32 %s193, 4
          %s196 = int_to_ptr.hbm [resolvable:$true] %s195
          %s197 = sshll.u32 %s189, 4
          %s198 = int_to_ptr.vmem [resolvable:$true] %s197
          %200 = dma.hbm_to_vmem [thread:$0]  %s196, 128, %s198, %s186
        $region32: #{tpu_custom_call.1} parent=27 // pred_fallthru
          _
      $region28: #{tpu_custom_call.1} parent=5 // pred_fallthru
        _
      %p201 = scmp.le.s32.totalorder 1, %s17
      %p202 = scmp.lt.s32.totalorder %s17, 3
      %p203 = pnand %p201, %p202
      %p204 = pneg %p203
      // Predicated region
      $region33: #{tpu_custom_call.1} parent=5 // pred_check
        _
      $region34: #{tpu_custom_call.1} parent=5 // pred_check_branch
        %206 = sbr.rel (%p203) target = $region36
      $region35: #{tpu_custom_call.1} parent=5 // pred_region
        %s207 = ssub.s32 %s17, 1
        %s208 = sand.u32 %s30, 1
        %s209 = scalar_lea.sflag [#allocation3], %s208
        %s210 = sand.u32 %s30, 1
        %s211 = smul.addr %s210, 8
        %s212 = scalar_lea.vmem [#allocation2], %s211
        // Predicated region
        $region37: #{tpu_custom_call.1} parent=35 // pred_check
          %p213 = pneg %p43
        $region38: #{tpu_custom_call.1} parent=35 // pred_check_branch
          %215 = sbr.rel (%p213) target = $region40
        $region39: #{tpu_custom_call.1} parent=35 // pred_region
          %217 = dma.done %s209, 128
        $region40: #{tpu_custom_call.1} parent=35 // pred_fallthru
          _
        // Predicated region
        $region41: #{tpu_custom_call.1} parent=35 // pred_check
          %p218 = pneg %p64
        $region42: #{tpu_custom_call.1} parent=35 // pred_check_branch
          %220 = sbr.rel (%p218) target = $region44
        $region43: #{tpu_custom_call.1} parent=35 // pred_region
          %222 = dma.done [#allocation6], 2048
        $region44: #{tpu_custom_call.1} parent=35 // pred_fallthru
          _
        // Predicated region
        $region45: #{tpu_custom_call.1} parent=35 // pred_check
          %p223 = pneg %p85
        $region46: #{tpu_custom_call.1} parent=35 // pred_check_branch
          %225 = sbr.rel (%p223) target = $region48
        $region47: #{tpu_custom_call.1} parent=35 // pred_region
          %227 = dma.done [#allocation6], 1024
        $region48: #{tpu_custom_call.1} parent=35 // pred_fallthru
          _
        %s228 = sand.u32 %s30, 1
        %s229 = scalar_lea.sflag [#allocation3], %s228
        %s230 = sand.u32 %s30, 1
        %s231 = smul.addr %s230, 8
        %s232 = scalar_lea.vmem [#allocation2], %s231
        %p233 = pneg %p43
        %p234 = pneg %p40
        %p235 = pneg %p64
        %p236 = pneg %p61
        %p237 = pneg %p85
        %p238 = pneg %p82
        %p239 = pneg %p106
        %p240 = pneg %p103
        %p241 = pneg %p132
        %p242 = pneg %p129
        %s243 = sand.u32 %s119, 1
        %s244 = scalar_lea.sflag [#allocation4], %s243
        %s245 = sand.u32 %s119, 1
        %s246 = smul.addr %s245, 8
        %s247 = scalar_lea.vmem [#allocation8], %s246
        %v248 = vld [vmem:[%s212] sm:$0xff]
        %v249 = vld [vmem:[#allocation5] sm:$0xff]
        %v250 = vld [vmem:[#allocation5 + $0x8] sm:$0xff]
        %v251 = vld [vmem:[#allocation5 + $0x10] sm:$0xff]
        %v252 = vld [vmem:[#allocation5 + $0x18] sm:$0xff]
        %vm253 = vcmask 261120
        %v255 = vsel %vm253, %v248, 0
        %257 = vmatpush.msra.mxu0 0.0
        %258 = vmatpush.msra.mxu0 0.0
        %259 = vmatpush.msra.mxu0 0.0
        %260 = vmatpush.msra.mxu0 0.0
        %261 = vmatpush.msra.mxu0 0.0
        %262 = vmatpush.msra.mxu0 0.0
        %263 = vmatpush.msra.mxu0 0.0
        %264 = vmatpush.msra.mxu0 0.0
        %265 = vmatpush.msra.mxu0 0.0
        %266 = vmatpush.msra.mxu0 0.0
        %267 = vmatpush.msra.mxu0 0.0
        %268 = vmatpush.msra.mxu0 0.0
        %269 = vmatpush.msra.mxu0 %v252
        %270 = vmatpush.msra.mxu0 %v251
        %271 = vmatpush.msra.mxu0 %v250
        %272 = vmatpush.msra.mxu0 %v249
        %273 = vmatmul.f32.gmra.mxu0 %v255
        %v274 = vpop.f32.mrf.mxu0
        %v275 = vadd.f32 0.0, %v274
        %276 = vdwg.mxu0
        %v277 = vmul.f32 %v275, 0.17677669
        %279 = vrot.lane.b32.xlu0 %v275, 112
        %v280 = vpop.permute.xlu0 %279
        %vm281 = vcmask 130048
        %v283 = vsel %vm281, %v277, 0
        %v285 = vsel %vm281, %v280, 0
        %287 = vmatpush.xpose.msra.mxu0 0.0
        %288 = vmatpush.xpose.msra.mxu0 0.0
        %289 = vmatpush.xpose.msra.mxu0 0.0
        %290 = vmatpush.xpose.msra.mxu0 0.0
        %291 = vmatpush.xpose.msra.mxu0 0.0
        %292 = vmatpush.xpose.msra.mxu0 0.0
        %293 = vmatpush.xpose.msra.mxu0 0.0
        %294 = vmatpush.xpose.msra.mxu0 0.0
        %295 = vmatpush.xpose.msra.mxu0 0.0
        %296 = vmatpush.xpose.msra.mxu0 0.0
        %297 = vmatpush.xpose.msra.mxu0 0.0
        %298 = vmatpush.xpose.msra.mxu0 0.0
        %299 = vmatpush.xpose.msra.mxu0 0.0
        %300 = vmatpush.xpose.msra.mxu0 0.0
        %301 = vmatpush.xpose.msra.mxu0 0.0
        %302 = vmatpush.xpose.msra.mxu0 %v285
        %303 = vmatmul.f32.gmra.mxu0 %v283
        %v304 = vpop.f32.mrf.mxu0
        %v305 = vadd.f32 0.0, %v304
        %306 = vdwg.mxu0
        %vm307 = vcmask 64512
        %v308 = vsel %vm307, %v305, -inf
        %309 = vmax.xlane.f32.xlu0 %v308
        %v310 = vpop.xlane.xlu0 %309
        %v311 = vsub.f32 %v305, %v310
        %v312 = vmul.f32 %v311, 1.442695
        %v313 = vpow.pop %v312
        %v314 = vsel %vm307, %v313, 0.0
        %315 = vadd.xlane.f32.xlu0 %v314
        %v316 = vpop.xlane.xlu0 %315
        %v317 = vrcp.pop %v316
        %v318 = vmul.f32 %v313, %v317
        %319 = vrot.lane.b32.xlu0 %v275, 96
        %v320 = vpop.permute.xlu0 %319
        %v323 = vsel %vm307, %v318, 0
        %325 = vmatpush.msra.mxu0 0.0
        %326 = vmatpush.msra.mxu0 0.0
        %327 = vmatpush.msra.mxu0 0.0
        %328 = vmatpush.msra.mxu0 0.0
        %329 = vmatpush.msra.mxu0 0.0
        %330 = vmatpush.msra.mxu0 0.0
        %331 = vmatpush.msra.mxu0 0.0
        %332 = vmatpush.msra.mxu0 0.0
        %333 = vmatpush.msra.mxu0 0.0
        %334 = vmatpush.msra.mxu0 0.0
        %335 = vmatpush.msra.mxu0 0.0
        %336 = vmatpush.msra.mxu0 0.0
        %337 = vmatpush.msra.mxu0 0.0
        %338 = vmatpush.msra.mxu0 0.0
        %339 = vmatpush.msra.mxu0 0.0
        %340 = vmatpush.msra.mxu0 %v320
        %341 = vmatmul.f32.gmra.mxu0 %v323
        %v342 = vpop.f32.mrf.mxu0
        %v343 = vadd.f32 0.0, %v342
        %344 = vdwg.mxu0
        %v345 = vld [vmem:[#allocation7] sm:$0xff]
        %v346 = vld [vmem:[#allocation7 + $0x8] sm:$0xff]
        %s347 = scalar_lea.vmem [#allocation5], 32
        %v348 = vld [vmem:[%s347] sm:$0xff]
        %v349 = vld [vmem:[%s347 + $0x8] sm:$0xff]
        %v350 = vld [vmem:[%s347 + $0x10] sm:$0xff]
        %v351 = vld [vmem:[%s347 + $0x18] sm:$0xff]
        %352 = vmatpush.msra.mxu0 0.0
        %353 = vmatpush.msra.mxu0 0.0
        %354 = vmatpush.msra.mxu0 0.0
        %355 = vmatpush.msra.mxu0 0.0
        %356 = vmatpush.msra.mxu0 0.0
        %357 = vmatpush.msra.mxu0 0.0
        %358 = vmatpush.msra.mxu0 0.0
        %359 = vmatpush.msra.mxu0 0.0
        %360 = vmatpush.msra.mxu0 0.0
        %361 = vmatpush.msra.mxu0 0.0
        %362 = vmatpush.msra.mxu0 0.0
        %363 = vmatpush.msra.mxu0 0.0
        %364 = vmatpush.msra.mxu0 %v351
        %365 = vmatpush.msra.mxu0 %v350
        %366 = vmatpush.msra.mxu0 %v349
        %367 = vmatpush.msra.mxu0 %v348
        %368 = vmatmul.f32.gmra.mxu0 %v255
        %v369 = vpop.f32.mrf.mxu0
        %v370 = vadd.f32 0.0, %v369
        %371 = vdwg.mxu0
        %v372 = vmul.f32 %v370, 0.17677669
        %374 = vrot.lane.b32.xlu0 %v370, 112
        %v375 = vpop.permute.xlu0 %374
        %v377 = vsel %vm281, %v372, 0
        %v379 = vsel %vm281, %v375, 0
        %381 = vmatpush.xpose.msra.mxu0 0.0
        %382 = vmatpush.xpose.msra.mxu0 0.0
        %383 = vmatpush.xpose.msra.mxu0 0.0
        %384 = vmatpush.xpose.msra.mxu0 0.0
        %385 = vmatpush.xpose.msra.mxu0 0.0
        %386 = vmatpush.xpose.msra.mxu0 0.0
        %387 = vmatpush.xpose.msra.mxu0 0.0
        %388 = vmatpush.xpose.msra.mxu0 0.0
        %389 = vmatpush.xpose.msra.mxu0 0.0
        %390 = vmatpush.xpose.msra.mxu0 0.0
        %391 = vmatpush.xpose.msra.mxu0 0.0
        %392 = vmatpush.xpose.msra.mxu0 0.0
        %393 = vmatpush.xpose.msra.mxu0 0.0
        %394 = vmatpush.xpose.msra.mxu0 0.0
        %395 = vmatpush.xpose.msra.mxu0 0.0
        %396 = vmatpush.xpose.msra.mxu0 %v379
        %397 = vmatmul.f32.gmra.mxu0 %v377
        %v398 = vpop.f32.mrf.mxu0
        %v399 = vadd.f32 0.0, %v398
        %400 = vdwg.mxu0
        %v401 = vsel %vm307, %v399, -inf
        %402 = vmax.xlane.f32.xlu0 %v401
        %v403 = vpop.xlane.xlu0 %402
        %v404 = vsub.f32 %v399, %v403
        %v405 = vmul.f32 %v404, 1.442695
        %v406 = vpow.pop %v405
        %v407 = vsel %vm307, %v406, 0.0
        %408 = vadd.xlane.f32.xlu0 %v407
        %v409 = vpop.xlane.xlu0 %408
        %v410 = vrcp.pop %v409
        %v411 = vmul.f32 %v406, %v410
        %412 = vrot.lane.b32.xlu0 %v370, 96
        %v413 = vpop.permute.xlu0 %412
        %v416 = vsel %vm307, %v411, 0
        %418 = vmatpush.msra.mxu0 0.0
        %419 = vmatpush.msra.mxu0 0.0
        %420 = vmatpush.msra.mxu0 0.0
        %421 = vmatpush.msra.mxu0 0.0
        %422 = vmatpush.msra.mxu0 0.0
        %423 = vmatpush.msra.mxu0 0.0
        %424 = vmatpush.msra.mxu0 0.0
        %425 = vmatpush.msra.mxu0 0.0
        %426 = vmatpush.msra.mxu0 0.0
        %427 = vmatpush.msra.mxu0 0.0
        %428 = vmatpush.msra.mxu0 0.0
        %429 = vmatpush.msra.mxu0 0.0
        %430 = vmatpush.msra.mxu0 0.0
        %431 = vmatpush.msra.mxu0 0.0
        %432 = vmatpush.msra.mxu0 0.0
        %433 = vmatpush.msra.mxu0 %v413
        %434 = vmatmul.f32.gmra.mxu0 %v416
        %v435 = vpop.f32.mrf.mxu0
        %v436 = vadd.f32 0.0, %v435
        %437 = vdwg.mxu0
        %s438 = scalar_lea.vmem [#allocation7], 16
        %v439 = vld [vmem:[%s438] sm:$0xff]
        %v440 = vld [vmem:[%s438 + $0x8] sm:$0xff]
        %v442 = vsel %vm281, %v436, 0
        %444 = vmatpush.msra.mxu0 0.0
        %445 = vmatpush.msra.mxu0 0.0
        %446 = vmatpush.msra.mxu0 0.0
        %447 = vmatpush.msra.mxu0 0.0
        %448 = vmatpush.msra.mxu0 0.0
        %449 = vmatpush.msra.mxu0 0.0
        %450 = vmatpush.msra.mxu0 0.0
        %451 = vmatpush.msra.mxu0 0.0
        %452 = vmatpush.msra.mxu0 0.0
        %453 = vmatpush.msra.mxu0 0.0
        %454 = vmatpush.msra.mxu0 0.0
        %455 = vmatpush.msra.mxu0 0.0
        %456 = vmatpush.msra.mxu0 0.0
        %457 = vmatpush.msra.mxu0 0.0
        %458 = vmatpush.msra.mxu0 %v440
        %459 = vmatpush.msra.mxu0 %v439
        %460 = vmatmul.f32.gmra.mxu0 %v442
        %v461 = vpop.f32.mrf.mxu0
        %v462 = vadd.f32 0.0, %v461
        %463 = vdwg.mxu0
        %v465 = vsel %vm281, %v343, 0
        %467 = vmatpush.msra.mxu0 0.0
        %468 = vmatpush.msra.mxu0 0.0
        %469 = vmatpush.msra.mxu0 0.0
        %470 = vmatpush.msra.mxu0 0.0
        %471 = vmatpush.msra.mxu0 0.0
        %472 = vmatpush.msra.mxu0 0.0
        %473 = vmatpush.msra.mxu0 0.0
        %474 = vmatpush.msra.mxu0 0.0
        %475 = vmatpush.msra.mxu0 0.0
        %476 = vmatpush.msra.mxu0 0.0
        %477 = vmatpush.msra.mxu0 0.0
        %478 = vmatpush.msra.mxu0 0.0
        %479 = vmatpush.msra.mxu0 0.0
        %480 = vmatpush.msra.mxu0 0.0
        %481 = vmatpush.msra.mxu0 %v346
        %482 = vmatpush.msra.mxu0 %v345
        %483 = vmatmul.f32.gmra.mxu0 %v465
        %v484 = vpop.f32.mrf.mxu0
        %v485 = vadd.f32 %v462, %v484
        %486 = vdwg.mxu0
        %s487 = scalar_lea.vmem [#allocation5], 64
        %v488 = vld [vmem:[%s487] sm:$0xff]
        %v489 = vld [vmem:[%s487 + $0x8] sm:$0xff]
        %v490 = vld [vmem:[%s487 + $0x10] sm:$0xff]
        %v491 = vld [vmem:[%s487 + $0x18] sm:$0xff]
        %492 = vmatpush.msra.mxu0 0.0
        %493 = vmatpush.msra.mxu0 0.0
        %494 = vmatpush.msra.mxu0 0.0
        %495 = vmatpush.msra.mxu0 0.0
        %496 = vmatpush.msra.mxu0 0.0
        %497 = vmatpush.msra.mxu0 0.0
        %498 = vmatpush.msra.mxu0 0.0
        %499 = vmatpush.msra.mxu0 0.0
        %500 = vmatpush.msra.mxu0 0.0
        %501 = vmatpush.msra.mxu0 0.0
        %502 = vmatpush.msra.mxu0 0.0
        %503 = vmatpush.msra.mxu0 0.0
        %504 = vmatpush.msra.mxu0 %v491
        %505 = vmatpush.msra.mxu0 %v490
        %506 = vmatpush.msra.mxu0 %v489
        %507 = vmatpush.msra.mxu0 %v488
        %508 = vmatmul.f32.gmra.mxu0 %v255
        %v509 = vpop.f32.mrf.mxu0
        %v510 = vadd.f32 0.0, %v509
        %511 = vdwg.mxu0
        %v512 = vmul.f32 %v510, 0.17677669
        %514 = vrot.lane.b32.xlu0 %v510, 112
        %v515 = vpop.permute.xlu0 %514
        %v517 = vsel %vm281, %v512, 0
        %v519 = vsel %vm281, %v515, 0
        %521 = vmatpush.xpose.msra.mxu0 0.0
        %522 = vmatpush.xpose.msra.mxu0 0.0
        %523 = vmatpush.xpose.msra.mxu0 0.0
        %524 = vmatpush.xpose.msra.mxu0 0.0
        %525 = vmatpush.xpose.msra.mxu0 0.0
        %526 = vmatpush.xpose.msra.mxu0 0.0
        %527 = vmatpush.xpose.msra.mxu0 0.0
        %528 = vmatpush.xpose.msra.mxu0 0.0
        %529 = vmatpush.xpose.msra.mxu0 0.0
        %530 = vmatpush.xpose.msra.mxu0 0.0
        %531 = vmatpush.xpose.msra.mxu0 0.0
        %532 = vmatpush.xpose.msra.mxu0 0.0
        %533 = vmatpush.xpose.msra.mxu0 0.0
        %534 = vmatpush.xpose.msra.mxu0 0.0
        %535 = vmatpush.xpose.msra.mxu0 0.0
        %536 = vmatpush.xpose.msra.mxu0 %v519
        %537 = vmatmul.f32.gmra.mxu0 %v517
        %v538 = vpop.f32.mrf.mxu0
        %v539 = vadd.f32 0.0, %v538
        %540 = vdwg.mxu0
        %v541 = vsel %vm307, %v539, -inf
        %542 = vmax.xlane.f32.xlu0 %v541
        %v543 = vpop.xlane.xlu0 %542
        %v544 = vsub.f32 %v539, %v543
        %v545 = vmul.f32 %v544, 1.442695
        %v546 = vpow.pop %v545
        %v547 = vsel %vm307, %v546, 0.0
        %548 = vadd.xlane.f32.xlu0 %v547
        %v549 = vpop.xlane.xlu0 %548
        %v550 = vrcp.pop %v549
        %v551 = vmul.f32 %v546, %v550
        %552 = vrot.lane.b32.xlu0 %v510, 96
        %v553 = vpop.permute.xlu0 %552
        %v556 = vsel %vm307, %v551, 0
        %558 = vmatpush.msra.mxu0 0.0
        %559 = vmatpush.msra.mxu0 0.0
        %560 = vmatpush.msra.mxu0 0.0
        %561 = vmatpush.msra.mxu0 0.0
        %562 = vmatpush.msra.mxu0 0.0
        %563 = vmatpush.msra.mxu0 0.0
        %564 = vmatpush.msra.mxu0 0.0
        %565 = vmatpush.msra.mxu0 0.0
        %566 = vmatpush.msra.mxu0 0.0
        %567 = vmatpush.msra.mxu0 0.0
        %568 = vmatpush.msra.mxu0 0.0
        %569 = vmatpush.msra.mxu0 0.0
        %570 = vmatpush.msra.mxu0 0.0
        %571 = vmatpush.msra.mxu0 0.0
        %572 = vmatpush.msra.mxu0 0.0
        %573 = vmatpush.msra.mxu0 %v553
        %574 = vmatmul.f32.gmra.mxu0 %v556
        %v575 = vpop.f32.mrf.mxu0
        %v576 = vadd.f32 0.0, %v575
        %577 = vdwg.mxu0
        %s578 = scalar_lea.vmem [#allocation7], 32
        %v579 = vld [vmem:[%s578] sm:$0xff]
        %v580 = vld [vmem:[%s578 + $0x8] sm:$0xff]
        %v582 = vsel %vm281, %v576, 0
        %584 = vmatpush.msra.mxu0 0.0
        %585 = vmatpush.msra.mxu0 0.0
        %586 = vmatpush.msra.mxu0 0.0
        %587 = vmatpush.msra.mxu0 0.0
        %588 = vmatpush.msra.mxu0 0.0
        %589 = vmatpush.msra.mxu0 0.0
        %590 = vmatpush.msra.mxu0 0.0
        %591 = vmatpush.msra.mxu0 0.0
        %592 = vmatpush.msra.mxu0 0.0
        %593 = vmatpush.msra.mxu0 0.0
        %594 = vmatpush.msra.mxu0 0.0
        %595 = vmatpush.msra.mxu0 0.0
        %596 = vmatpush.msra.mxu0 0.0
        %597 = vmatpush.msra.mxu0 0.0
        %598 = vmatpush.msra.mxu0 %v580
        %599 = vmatpush.msra.mxu0 %v579
        %600 = vmatmul.f32.gmra.mxu0 %v582
        %v601 = vpop.f32.mrf.mxu0
        %v602 = vadd.f32 0.0, %v601
        %603 = vdwg.mxu0
        %v604 = vadd.f32 %v485, %v602
        %s605 = scalar_lea.vmem [#allocation5], 96
        %v606 = vld [vmem:[%s605] sm:$0xff]
        %v607 = vld [vmem:[%s605 + $0x8] sm:$0xff]
        %v608 = vld [vmem:[%s605 + $0x10] sm:$0xff]
        %v609 = vld [vmem:[%s605 + $0x18] sm:$0xff]
        %610 = vmatpush.msra.mxu0 0.0
        %611 = vmatpush.msra.mxu0 0.0
        %612 = vmatpush.msra.mxu0 0.0
        %613 = vmatpush.msra.mxu0 0.0
        %614 = vmatpush.msra.mxu0 0.0
        %615 = vmatpush.msra.mxu0 0.0
        %616 = vmatpush.msra.mxu0 0.0
        %617 = vmatpush.msra.mxu0 0.0
        %618 = vmatpush.msra.mxu0 0.0
        %619 = vmatpush.msra.mxu0 0.0
        %620 = vmatpush.msra.mxu0 0.0
        %621 = vmatpush.msra.mxu0 0.0
        %622 = vmatpush.msra.mxu0 %v609
        %623 = vmatpush.msra.mxu0 %v608
        %624 = vmatpush.msra.mxu0 %v607
        %625 = vmatpush.msra.mxu0 %v606
        %626 = vmatmul.f32.gmra.mxu0 %v255
        %v627 = vpop.f32.mrf.mxu0
        %v628 = vadd.f32 0.0, %v627
        %629 = vdwg.mxu0
        %v630 = vmul.f32 %v628, 0.17677669
        %632 = vrot.lane.b32.xlu0 %v628, 112
        %v633 = vpop.permute.xlu0 %632
        %v635 = vsel %vm281, %v630, 0
        %v637 = vsel %vm281, %v633, 0
        %639 = vmatpush.xpose.msra.mxu0 0.0
        %640 = vmatpush.xpose.msra.mxu0 0.0
        %641 = vmatpush.xpose.msra.mxu0 0.0
        %642 = vmatpush.xpose.msra.mxu0 0.0
        %643 = vmatpush.xpose.msra.mxu0 0.0
        %644 = vmatpush.xpose.msra.mxu0 0.0
        %645 = vmatpush.xpose.msra.mxu0 0.0
        %646 = vmatpush.xpose.msra.mxu0 0.0
        %647 = vmatpush.xpose.msra.mxu0 0.0
        %648 = vmatpush.xpose.msra.mxu0 0.0
        %649 = vmatpush.xpose.msra.mxu0 0.0
        %650 = vmatpush.xpose.msra.mxu0 0.0
        %651 = vmatpush.xpose.msra.mxu0 0.0
        %652 = vmatpush.xpose.msra.mxu0 0.0
        %653 = vmatpush.xpose.msra.mxu0 0.0
        %654 = vmatpush.xpose.msra.mxu0 %v637
        %655 = vmatmul.f32.gmra.mxu0 %v635
        %v656 = vpop.f32.mrf.mxu0
        %v657 = vadd.f32 0.0, %v656
        %658 = vdwg.mxu0
        %v659 = vsel %vm307, %v657, -inf
        %660 = vmax.xlane.f32.xlu0 %v659
        %v661 = vpop.xlane.xlu0 %660
        %v662 = vsub.f32 %v657, %v661
        %v663 = vmul.f32 %v662, 1.442695
        %v664 = vpow.pop %v663
        %v665 = vsel %vm307, %v664, 0.0
        %666 = vadd.xlane.f32.xlu0 %v665
        %v667 = vpop.xlane.xlu0 %666
        %v668 = vrcp.pop %v667
        %v669 = vmul.f32 %v664, %v668
        %670 = vrot.lane.b32.xlu0 %v628, 96
        %v671 = vpop.permute.xlu0 %670
        %v674 = vsel %vm307, %v669, 0
        %676 = vmatpush.msra.mxu0 0.0
        %677 = vmatpush.msra.mxu0 0.0
        %678 = vmatpush.msra.mxu0 0.0
        %679 = vmatpush.msra.mxu0 0.0
        %680 = vmatpush.msra.mxu0 0.0
        %681 = vmatpush.msra.mxu0 0.0
        %682 = vmatpush.msra.mxu0 0.0
        %683 = vmatpush.msra.mxu0 0.0
        %684 = vmatpush.msra.mxu0 0.0
        %685 = vmatpush.msra.mxu0 0.0
        %686 = vmatpush.msra.mxu0 0.0
        %687 = vmatpush.msra.mxu0 0.0
        %688 = vmatpush.msra.mxu0 0.0
        %689 = vmatpush.msra.mxu0 0.0
        %690 = vmatpush.msra.mxu0 0.0
        %691 = vmatpush.msra.mxu0 %v671
        %692 = vmatmul.f32.gmra.mxu0 %v674
        %v693 = vpop.f32.mrf.mxu0
        %v694 = vadd.f32 0.0, %v693
        %695 = vdwg.mxu0
        %s696 = scalar_lea.vmem [#allocation7], 48
        %v697 = vld [vmem:[%s696] sm:$0xff]
        %v698 = vld [vmem:[%s696 + $0x8] sm:$0xff]
        %v700 = vsel %vm281, %v694, 0
        %702 = vmatpush.msra.mxu0 0.0
        %703 = vmatpush.msra.mxu0 0.0
        %704 = vmatpush.msra.mxu0 0.0
        %705 = vmatpush.msra.mxu0 0.0
        %706 = vmatpush.msra.mxu0 0.0
        %707 = vmatpush.msra.mxu0 0.0
        %708 = vmatpush.msra.mxu0 0.0
        %709 = vmatpush.msra.mxu0 0.0
        %710 = vmatpush.msra.mxu0 0.0
        %711 = vmatpush.msra.mxu0 0.0
        %712 = vmatpush.msra.mxu0 0.0
        %713 = vmatpush.msra.mxu0 0.0
        %714 = vmatpush.msra.mxu0 0.0
        %715 = vmatpush.msra.mxu0 0.0
        %716 = vmatpush.msra.mxu0 %v698
        %717 = vmatpush.msra.mxu0 %v697
        %718 = vmatmul.f32.gmra.mxu0 %v700
        %v719 = vpop.f32.mrf.mxu0
        %v720 = vadd.f32 0.0, %v719
        %721 = vdwg.mxu0
        %v722 = vadd.f32 %v604, %v720
        %v723 = vld [vmem:[%s3] sm:$0x1]
        %v725 = vperm.slane %v723, 0
        %v727 = vadd.f32 %v722, %v725
        %728 = vst.msk [vmem:[%s247] sm:$0xff] %vm253, %v727
        %s729 = sand.u32 %s119, 1
        %s730 = scalar_lea.sflag [#allocation4], %s729
        %s731 = sand.u32 %s119, 1
        %s732 = smul.addr %s731, 8
        %s733 = scalar_lea.vmem [#allocation8], %s732
        // Predicated region
        $region49: #{tpu_custom_call.1} parent=35 // pred_check
          %p734 = pneg %p129
        $region50: #{tpu_custom_call.1} parent=35 // pred_check_branch
          %736 = sbr.rel (%p734) target = $region52
        $region51: #{tpu_custom_call.1} parent=35 // pred_region
          %738 = vsyncadd %s730, 0
          %s739 = smul.addr %s22, 8
          %s740 = scalar_lea.hbm %s4, %s739
          %s742 = sshll.u32 %s733, 4
          %s743 = int_to_ptr.vmem [resolvable:$true] %s742
          %s744 = sshll.u32 %s740, 4
          %s745 = int_to_ptr.hbm [resolvable:$true] %s744
          %747 = dma.vmem_to_hbm [thread:$0]  %s743, 128, %s745, %s730
        $region52: #{tpu_custom_call.1} parent=35 // pred_fallthru
          _
      $region36: #{tpu_custom_call.1} parent=5 // pred_fallthru
        _
      %p748 = scmp.le.s32.totalorder 2, %s17
      // Predicated region
      $region53: #{tpu_custom_call.1} parent=5 // pred_check
        %p749 = pneg %p748
      $region54: #{tpu_custom_call.1} parent=5 // pred_check_branch
        %751 = sbr.rel (%p749) target = $region56
      $region55: #{tpu_custom_call.1} parent=5 // pred_region
        %s752 = ssub.s32 %s17, 2
        // Predicated region
        $region57: #{tpu_custom_call.1} parent=55 // pred_check
          %p753 = pneg %p135
        $region58: #{tpu_custom_call.1} parent=55 // pred_check_branch
          %755 = sbr.rel (%p753) target = $region60
        $region59: #{tpu_custom_call.1} parent=55 // pred_region
          %s756 = sand.u32 %s120, 1
          %s757 = scalar_lea.sflag [#allocation4], %s756
          %s758 = sand.u32 %s120, 1
          %s759 = smul.addr %s758, 8
          %s760 = scalar_lea.vmem [#allocation8], %s759
          %762 = dma.done %s757, 128
        $region60: #{tpu_custom_call.1} parent=55 // pred_fallthru
          _
      $region56: #{tpu_custom_call.1} parent=5 // pred_fallthru
        _
    $region6: #{tpu_custom_call.1} parent=1 // loop_footer
      %s21 = sadd.s32 1, %s17
    $region7: #{tpu_custom_call.1} parent=1 // loop_footer_branch
      %16 = sbr.rel target = $region3
    $region8: #{tpu_custom_call.1} parent=1 // loop_exit
      _
    %763 = vsyncpa [#allocation3], 1
    %s764 = scalar_lea.sflag [#allocation3], 1
    %765 = vsyncpa %s764, 1
    %766 = vsyncpa [#allocation6], 1
    %767 = vsyncpa [#allocation4], 1
    %s768 = scalar_lea.sflag [#allocation4], 1
    %769 = vsyncpa %s768, 1

</llo_original>
